<compile_context>
chip_gen: v6e
topology: v6e:2x2x1
jax: 0.10.0
libtpu: 0.0.40
codegen_flags: <defaults>
</compile_context>

<pallas_src>
import functools

import jax
import jax.numpy as jnp
from jax.experimental import pallas as pl
from jax.experimental.pallas import tpu as pltpu


_TILE_M_CAP = 4096                 # ~256 KiB bf16 in + 256 KiB out per step
_GRAD_TILE_BYTES = 4 * 1024 * 1024  # ~4 MiB grad blocks: DMA-bound even at v7x's 3.2 TB/s
_VMEM_LIMIT = 32 * 1024 * 1024


def _round_up(x, m):
    return ((x + m - 1) // m) * m


# ---------------------------------------------------------------------------
# Forward kernel: fused MLP  (x @ W1 + b1 -> tanh-GELU -> @ W2 + b2)
# ---------------------------------------------------------------------------
def _mlp_kernel(x_ref, w1_ref, b1_ref, w2_ref, b2_ref, o_ref):
    # Native-dtype (bf16) operands straight into the MXU; accumulate in f32.
    h = jnp.dot(x_ref[...], w1_ref[...], preferred_element_type=jnp.float32)
    h = h + b1_ref[...].astype(jnp.float32)
    h = jax.nn.gelu(h, approximate=True)          # tanh-GELU on the EUP path
    y = jnp.dot(h.astype(w2_ref.dtype), w2_ref[...],
                preferred_element_type=jnp.float32)
    y = y + b2_ref[...].astype(jnp.float32)
    o_ref[...] = y.astype(o_ref.dtype)            # minimal (d_out-lane) store, no padding


def _pick_tile_m(M):
    # Single grid step for small/medium M; 4096-row steps for large M so each
    # step moves enough bytes to amortize the ~0.35 us/step pipeline overhead.
    # M >= 32768 then yields >= 8 grid steps for the v7x two-TC "parallel" split.
    m16 = _round_up(M, 16)   # bf16 sublane packing: keep row blocks a multiple of 16
    return m16 if m16 <= _TILE_M_CAP else _TILE_M_CAP


def mlp_forward(x2d, w1, b1, w2, b2):
    M, H = x2d.shape
    Hmid = w1.shape[1]
    Dout = w2.shape[1]
    tile_m = _pick_tile_m(M)
    M_pad = _round_up(M, tile_m)
    if M_pad != M:
        x2d = jnp.pad(x2d, ((0, M_pad - M), (0, 0)))   # row pad only (rarely taken)
    y = pl.pallas_call(
        _mlp_kernel,
        out_shape=jax.ShapeDtypeStruct((M_pad, Dout), x2d.dtype),
        grid_spec=pltpu.PrefetchScalarGridSpec(
            num_scalar_prefetch=0,
            grid=(M_pad // tile_m,),
            in_specs=[
                pl.BlockSpec((tile_m, H), lambda i: (i, 0)),
                pl.BlockSpec((H, Hmid), lambda i: (0, 0)),     # weights resident
                pl.BlockSpec((1, Hmid), lambda i: (0, 0)),
                pl.BlockSpec((Hmid, Dout), lambda i: (0, 0)),
                pl.BlockSpec((1, Dout), lambda i: (0, 0)),
            ],
            out_specs=pl.BlockSpec((tile_m, Dout), lambda i: (i, 0)),
        ),
        compiler_params=pltpu.CompilerParams(
            dimension_semantics=("parallel",),
            vmem_limit_bytes=_VMEM_LIMIT),
    )(x2d, w1, b1, w2, b2)
    if M_pad != M:
        y = y[:M]
    return y


# ---------------------------------------------------------------------------
# Grad-stats kernels: per-tensor, in-place reads, scalar (1,1) outputs.
#   sumsq  = sum(g^2)            (f32)
#   probe  = sum(g * 0)          (0.0 if every element is finite, NaN otherwise;
#                                 one mul/elem instead of isfinite->cast->min)
# ---------------------------------------------------------------------------
def _make_grad_stats_kernel(rows, tile_rows):
    needs_mask = (rows % tile_rows) != 0

    def kernel(g_ref, probe_ref, ss_ref):
        @pl.when(pl.program_id(0) == 0)
        def _():
            probe_ref[...] = jnp.zeros_like(probe_ref)
            ss_ref[...] = jnp.zeros_like(ss_ref)

        g = g_ref[...].astype(jnp.float32)
        if needs_mask:
            # Last block reads past the end of the array; zero the garbage rows
            # (zeros are finite and norm-neutral).
            valid = rows - pl.program_id(0) * tile_rows
            rid = jax.lax.broadcasted_iota(jnp.int32, g.shape, 0)
            g = jnp.where(rid < valid, g, 0.0)

        ss_ref[...] = ss_ref[...] + jnp.sum(g * g)
        probe_ref[...] = probe_ref[...] + jnp.sum(g * jnp.float32(0.0))

    return kernel


def _grad_tile_rows(rows, cols, itemsize):
    fit = _GRAD_TILE_BYTES // max(1, cols * itemsize)
    if fit >= rows:
        return rows                        # whole tensor in one block
    # multiple of 32 rows: safe sublane tiling for f32/bf16/int8 grads alike
    return max(32, (fit // 32) * 32)
    # TODO(synk): tensors with a huge last dim would also need column tiling.


def _as_2d(g):
    if g.ndim == 0:
        return g.reshape(1, 1)
    if g.ndim == 1:
        return g.reshape(1, -1)
    if g.ndim == 2:
        return g
    return g.reshape(-1, g.shape[-1])


def _grad_stats_one(g2d):
    rows, cols = g2d.shape
    tile_rows = _grad_tile_rows(rows, cols, jnp.dtype(g2d.dtype).itemsize)
    grid = pl.cdiv(rows, tile_rows)
    probe, ss = pl.pallas_call(
        _make_grad_stats_kernel(rows, tile_rows),
        out_shape=(jax.ShapeDtypeStruct((1, 1), jnp.float32),
                   jax.ShapeDtypeStruct((1, 1), jnp.float32)),
        grid_spec=pltpu.PrefetchScalarGridSpec(
            num_scalar_prefetch=0,
            grid=(grid,),
            in_specs=[pl.BlockSpec((tile_rows, cols), lambda i: (i, 0))],
            out_specs=(pl.BlockSpec((1, 1), lambda i: (0, 0)),
                       pl.BlockSpec((1, 1), lambda i: (0, 0))),
        ),
        compiler_params=pltpu.CompilerParams(
            dimension_semantics=("arbitrary",),   # resident scalar accumulators
            vmem_limit_bytes=_VMEM_LIMIT),
    )(g2d)
    return probe[0, 0], ss[0, 0]


def grad_global_stats(grads):
    """Returns (all_finite: bool scalar, sum_of_squares: f32 scalar) over grads,
    reading every grad tensor in place (no concat slab)."""
    probes, sumsqs = [], []
    for g in grads:
        p, s = _grad_stats_one(_as_2d(g))
        probes.append(p)
        sumsqs.append(s)
    probe_total = jnp.sum(jnp.stack(probes)) if probes else jnp.float32(0.0)
    sumsq_total = jnp.sum(jnp.stack(sumsqs)) if sumsqs else jnp.float32(0.0)
    return jnp.isfinite(probe_total), sumsq_total
    # TODO(synk): f32 sum-of-squares can overflow to inf for huge-but-finite grads;
    # only affects the clip norm, not the finiteness probe.


# ---------------------------------------------------------------------------
# jitted glue (fuses the select / scale ops around the pallas_calls)
# ---------------------------------------------------------------------------
@jax.jit
def _mlp_apply(x, w1, b1, w2, b2):
    B, S, H = x.shape
    y = mlp_forward(x.reshape(B * S, H), w1, b1, w2, b2)
    return y.reshape(B, S, -1)


@jax.jit
def _zero_grad_bypass(grads):
    all_finite, _ = grad_global_stats(grads)
    # keep grads if every value is finite (bypassed zero_grad), else zero them
    return [jnp.where(all_finite, g, jnp.zeros_like(g)) for g in grads]


@jax.jit
def _clip_grads(grads, max_norm):
    _, sumsq = grad_global_stats(grads)
    total_norm = jnp.sqrt(sumsq)
    coef = jnp.minimum(max_norm / (total_norm + 1e-6), 1.0)
    return [(g.astype(jnp.float32) * coef).astype(g.dtype) for g in grads]


# ---------------------------------------------------------------------------
# Modules (plain-Python glue; compute lives in the Pallas kernels above)
# ---------------------------------------------------------------------------
class InnerMLP:
    def __init__(self, key, d_in=32, d_hidden=64, d_out=32, dtype=jnp.bfloat16):
        k1, k2 = jax.random.split(key)
        s1 = 1.0 / (d_in ** 0.5)
        s2 = 1.0 / (d_hidden ** 0.5)
        self.w1 = jax.random.uniform(k1, (d_in, d_hidden), jnp.float32,
                                     minval=-s1, maxval=s1).astype(dtype)
        self.b1 = jnp.zeros((d_hidden,), dtype)
        self.w2 = jax.random.uniform(k2, (d_hidden, d_out), jnp.float32,
                                     minval=-s2, maxval=s2).astype(dtype)
        self.b2 = jnp.zeros((d_out,), dtype)
        self.d_out = d_out

    def parameters(self):
        return [self.w1, self.b1, self.w2, self.b2]

    def forward(self, x):  # x: [B, S, H]
        return _mlp_apply(x, self.w1, self.b1.reshape(1, -1),
                          self.w2, self.b2.reshape(1, -1))


class IgnoreGradManipulations:
    """Wrapper that blocks gradient manipulations (zero_grad / clip_grad_norm_)."""

    def __init__(self, module, override_clipping=True, override_zero_grad=True):
        self.module = module
        self.override_clipping = override_clipping
        self.override_zero_grad = override_zero_grad

    # forward: pure delegation (matches the PyTorch wrapper exactly)
    def forward(self, *args, **kwargs):
        return self.module.forward(*args, **kwargs)

    # JAX grads are functional values, not stateful .grad buffers; these take and
    # return grad lists to mirror the torch semantics.
    def zero_grad(self, grads, set_to_none=False):
        if not self.override_zero_grad:
            return [None for _ in grads] if set_to_none else \
                   [jnp.zeros_like(g) for g in grads]
        # TODO(synk): set_to_none has no data-dependent on-device equivalent; the
        # non-finite branch returns zeros instead of None.
        return _zero_grad_bypass(list(grads))

    def clip_grad_norm_(self, grads, max_norm, norm_type=2):
        if self.override_clipping:
            return grads  # bypassed clip_grad_norm_
        # TODO(synk): only norm_type == 2 supported in the Pallas reduction path.
        return _clip_grads(list(grads), jnp.float32(max_norm))


# ---------------------------------------------------------------------------
if __name__ == "__main__":
    key = jax.random.PRNGKey(0)
    k_param, k_x, k_g = jax.random.split(key, 3)

    inner = InnerMLP(k_param, d_in=32, d_hidden=64, d_out=32, dtype=jnp.bfloat16)
    model = IgnoreGradManipulations(inner)

    # forward pass through the wrapper (delegates to inner module's Pallas MLP)
    x = jax.random.normal(k_x, (2, 8, 32), jnp.float32).astype(jnp.bfloat16)
    y = model.forward(x)
    y = jax.block_until_ready(y)
    assert y.shape == (2, 8, 32)

    # reference check of the fused kernel (f32 reference built from the bf16 params)
    xf = x.astype(jnp.float32).reshape(-1, 32)
    w1f, b1f = inner.w1.astype(jnp.float32), inner.b1.astype(jnp.float32)
    w2f, b2f = inner.w2.astype(jnp.float32), inner.b2.astype(jnp.float32)
    h_ref = jax.nn.gelu(xf @ w1f + b1f, approximate=True)
    y_ref = (h_ref @ w2f + b2f).reshape(2, 8, 32)
    assert jnp.allclose(y.astype(jnp.float32), y_ref, atol=3e-2, rtol=3e-2)

    # exercise the grad-manipulation paths with synthetic gradients
    fake_grads = [jax.random.normal(k_g, p.shape, jnp.float32).astype(p.dtype)
                  for p in inner.parameters()]

    g_after = model.zero_grad(fake_grads)            # bypassed (all finite)
    g_after = model.clip_grad_norm_(g_after, 1.0)    # bypassed
    jax.block_until_ready(g_after[0])
    assert jnp.allclose(g_after[0].astype(jnp.float32),
                        fake_grads[0].astype(jnp.float32))   # grads untouched

    # non-finite branch: a single NaN must zero all grads
    bad_grads = [fake_grads[0].at[0, 0].set(jnp.nan)] + fake_grads[1:]
    z = model.zero_grad(bad_grads)
    jax.block_until_ready(z[0])
    assert bool(jnp.all(z[1] == 0)) and bool(jnp.all(z[0] == 0))

    # non-bypassed clip path: check the Pallas global-norm against a jnp reference
    model_clip = IgnoreGradManipulations(inner, override_clipping=False)
    clipped = model_clip.clip_grad_norm_(fake_grads, 1.0)
    jax.block_until_ready(clipped[0])
    ref_norm = jnp.sqrt(sum(jnp.sum(g.astype(jnp.float32) ** 2) for g in fake_grads))
    ref_coef = jnp.minimum(1.0 / (ref_norm + 1e-6), 1.0)
    ref_clip0 = (fake_grads[0].astype(jnp.float32) * ref_coef).astype(fake_grads[0].dtype)
    assert jnp.allclose(clipped[0].astype(jnp.float32),
                        ref_clip0.astype(jnp.float32), atol=1e-2, rtol=1e-2)

    print("KERNEL_OK")
</pallas_src>

<mosaic_0001>
module attributes {stable_mosaic.version = 11 : i64} {
  func.func @_mlp_kernel(%arg0: i32, %arg1: memref<16x32xbf16, #tpu.memory_space<vmem>>, %arg2: memref<32x64xbf16, #tpu.memory_space<vmem>>, %arg3: memref<1x64xbf16, #tpu.memory_space<vmem>>, %arg4: memref<64x32xbf16, #tpu.memory_space<vmem>>, %arg5: memref<1x32xbf16, #tpu.memory_space<vmem>>, %arg6: memref<16x32xbf16, #tpu.memory_space<vmem>>) attributes {dimension_semantics = [#tpu.dimension_semantics<parallel>], iteration_bounds = array<i64: 1>, scalar_prefetch = 0 : i64, scratch_operands = 0 : i64, tpu.core_type = #tpu.core_type<tc>, window_params = [{transform_indices = @transform_0, window_bounds = array<i64: 16, 32>}, {pipeline_mode = #tpu.pipeline_mode<synchronous>, transform_indices = @transform_1, window_bounds = array<i64: 32, 64>}, {pipeline_mode = #tpu.pipeline_mode<synchronous>, transform_indices = @transform_2, window_bounds = array<i64: 1, 64>}, {pipeline_mode = #tpu.pipeline_mode<synchronous>, transform_indices = @transform_3, window_bounds = array<i64: 64, 32>}, {pipeline_mode = #tpu.pipeline_mode<synchronous>, transform_indices = @transform_4, window_bounds = array<i64: 1, 32>}, {transform_indices = @transform_5, window_bounds = array<i64: 16, 32>}]} {
    %c0 = arith.constant 0 : index
    %c0_0 = arith.constant 0 : index
    %0 = vector.load %arg1[%c0, %c0_0] : memref<16x32xbf16, #tpu.memory_space<vmem>>, vector<16x32xbf16>
    %c0_1 = arith.constant 0 : index
    %c0_2 = arith.constant 0 : index
    %1 = vector.load %arg2[%c0_1, %c0_2] : memref<32x64xbf16, #tpu.memory_space<vmem>>, vector<32x64xbf16>
    %cst = arith.constant dense<0.000000e+00> : vector<16x64xf32>
    %2 = tpu.matmul %0, %1, %cst {dimension_numbers = #tpu.dot_dimension_numbers<[1], [0], [0], [1], [0, 0, 1, 1], [], []>} : vector<16x32xbf16>, vector<32x64xbf16>, vector<16x64xf32> -> vector<16x64xf32>
    %c0_3 = arith.constant 0 : index
    %c0_4 = arith.constant 0 : index
    %3 = vector.load %arg3[%c0_3, %c0_4] : memref<1x64xbf16, #tpu.memory_space<vmem>>, vector<1x64xbf16>
    %4 = arith.extf %3 : vector<1x64xbf16> to vector<1x64xf32>
    %5 = vector.broadcast %4 : vector<1x64xf32> to vector<16x64xf32>
    %6 = arith.addf %2, %5 : vector<16x64xf32>
    %7 = arith.mulf %6, %6 : vector<16x64xf32>
    %8 = arith.mulf %6, %7 : vector<16x64xf32>
    %cst_5 = arith.constant 4.471500e-02 : f32
    %9 = vector.broadcast %cst_5 : f32 to vector<16x64xf32>
    %10 = arith.mulf %9, %8 : vector<16x64xf32>
    %11 = arith.addf %6, %10 : vector<16x64xf32>
    %cst_6 = arith.constant 0.797884583 : f32
    %12 = vector.broadcast %cst_6 : f32 to vector<16x64xf32>
    %13 = arith.mulf %12, %11 : vector<16x64xf32>
    %14 = math.tanh %13 : vector<16x64xf32>
    %cst_7 = arith.constant 1.000000e+00 : f32
    %15 = vector.broadcast %cst_7 : f32 to vector<16x64xf32>
    %16 = arith.addf %15, %14 : vector<16x64xf32>
    %cst_8 = arith.constant 5.000000e-01 : f32
    %17 = vector.broadcast %cst_8 : f32 to vector<16x64xf32>
    %18 = arith.mulf %17, %16 : vector<16x64xf32>
    %19 = arith.mulf %6, %18 : vector<16x64xf32>
    %20 = arith.truncf %19 : vector<16x64xf32> to vector<16x64xbf16>
    %c0_9 = arith.constant 0 : index
    %c0_10 = arith.constant 0 : index
    %21 = vector.load %arg4[%c0_9, %c0_10] : memref<64x32xbf16, #tpu.memory_space<vmem>>, vector<64x32xbf16>
    %cst_11 = arith.constant dense<0.000000e+00> : vector<16x32xf32>
    %22 = tpu.matmul %20, %21, %cst_11 {dimension_numbers = #tpu.dot_dimension_numbers<[1], [0], [0], [1], [0, 0, 1, 1], [], []>} : vector<16x64xbf16>, vector<64x32xbf16>, vector<16x32xf32> -> vector<16x32xf32>
    %c0_12 = arith.constant 0 : index
    %c0_13 = arith.constant 0 : index
    %23 = vector.load %arg5[%c0_12, %c0_13] : memref<1x32xbf16, #tpu.memory_space<vmem>>, vector<1x32xbf16>
    %24 = arith.extf %23 : vector<1x32xbf16> to vector<1x32xf32>
    %25 = vector.broadcast %24 : vector<1x32xf32> to vector<16x32xf32>
    %26 = arith.addf %22, %25 : vector<16x32xf32>
    %27 = arith.truncf %26 : vector<16x32xf32> to vector<16x32xbf16>
    %c0_14 = arith.constant 0 : index
    %c0_15 = arith.constant 0 : index
    %28 = vector.load %arg6[%c0_14, %c0_15] : memref<16x32xbf16, #tpu.memory_space<vmem>>, vector<16x32xbf16>
    tpu.vector_store %arg6[%c0_14, %c0_15], %27 {strides = array<i32>} : memref<16x32xbf16, #tpu.memory_space<vmem>>, vector<16x32xbf16>,
    return
  }
  func.func @transform_0(%arg0: i32) -> (i32, i32) {
    %c0_i32 = arith.constant 0 : i32
    %c0_i32_0 = arith.constant 0 : i32
    return %arg0, %c0_i32 : i32, i32
  }
  func.func @transform_1(%arg0: i32) -> (i32, i32) {
    %c0_i32 = arith.constant 0 : i32
    %c0_i32_0 = arith.constant 0 : i32
    %c0_i32_1 = arith.constant 0 : i32
    return %c0_i32, %c0_i32_0 : i32, i32
  }
  func.func @transform_2(%arg0: i32) -> (i32, i32) {
    %c0_i32 = arith.constant 0 : i32
    %c0_i32_0 = arith.constant 0 : i32
    %c0_i32_1 = arith.constant 0 : i32
    return %c0_i32, %c0_i32_0 : i32, i32
  }
  func.func @transform_3(%arg0: i32) -> (i32, i32) {
    %c0_i32 = arith.constant 0 : i32
    %c0_i32_0 = arith.constant 0 : i32
    %c0_i32_1 = arith.constant 0 : i32
    return %c0_i32, %c0_i32_0 : i32, i32
  }
  func.func @transform_4(%arg0: i32) -> (i32, i32) {
    %c0_i32 = arith.constant 0 : i32
    %c0_i32_0 = arith.constant 0 : i32
    %c0_i32_1 = arith.constant 0 : i32
    return %c0_i32, %c0_i32_0 : i32, i32
  }
  func.func @transform_5(%arg0: i32) -> (i32, i32) {
    %c0_i32 = arith.constant 0 : i32
    %c0_i32_0 = arith.constant 0 : i32
    return %arg0, %c0_i32 : i32, i32
  }
}

</mosaic_0001>

<llo_original>
// kernel: _mlp_apply.1
$region0: #{_mlp_apply.1}
  #allocation0 [shape = 'u32[]', space=smem, size = 0x4, offset = 0x4, fixed_abs, tag = 'smem constant byte address 0x4 - core index']
  #allocation1 [shape = 'u32[144,128]{1,0:T(1,128)}', space=vmem, size = 0x12000, scoped, tag = 'internal scratch']
  %s0 = inlined_call_operand.vmem [shape: bf16[16,32], index: 0, kind: input, shape index: {}]
  %s1 = inlined_call_operand.vmem [shape: bf16[32,64], index: 1, kind: input, shape index: {}]
  %s2 = inlined_call_operand.vmem [shape: bf16[1,64], index: 2, kind: input, shape index: {}]
  %s3 = inlined_call_operand.vmem [shape: bf16[64,32], index: 3, kind: input, shape index: {}]
  %s4 = inlined_call_operand.vmem [shape: bf16[1,32], index: 4, kind: input, shape index: {}]
  %s5 = inlined_call_operand.hbm [shape: bf16[16,32], index: 5, kind: output, shape index: {}]
  %s6 = sld [smem:[#allocation0]]
  $region30: #{_mlp_apply.1} parent=0
    _
  %s8 = ssub.s32 1, %s6
  %s9 = scalar_select 0, %s8, %s6
  $region1: #{_mlp_apply.1} parent=0
    #allocation2 [shape = 'u8[4096]{0}', space=vmem, size = 0x1000, scoped, tag = 'output window, operand 0, single buffered']
    #allocation3 [shape = 's32[1]{0}', space=sflag, size = 0x4, scoped, tag = 'scoped memory for _mlp_apply.1']
    %10 = vsyncpa [#allocation3], 0
    // Predicated region
    $region2: #{_mlp_apply.1} parent=1 // pred_check
      _
    $region3: #{_mlp_apply.1} parent=1 // pred_check_branch
      %12 = sbr.rel (0) target = $region5
    $region4: #{_mlp_apply.1} parent=1 // pred_region
      _
    $region5: #{_mlp_apply.1} parent=1 // pred_fallthru
      _
    // Predicated region
    $region6: #{_mlp_apply.1} parent=1 // pred_check
      _
    $region7: #{_mlp_apply.1} parent=1 // pred_check_branch
      %14 = sbr.rel (0) target = $region9
    $region8: #{_mlp_apply.1} parent=1 // pred_region
      _
    $region9: #{_mlp_apply.1} parent=1 // pred_fallthru
      _
    // Predicated region
    $region10: #{_mlp_apply.1} parent=1 // pred_check
      _
    $region11: #{_mlp_apply.1} parent=1 // pred_check_branch
      %16 = sbr.rel (0) target = $region13
    $region12: #{_mlp_apply.1} parent=1 // pred_region
      _
    $region13: #{_mlp_apply.1} parent=1 // pred_fallthru
      _
    // Predicated region
    $region14: #{_mlp_apply.1} parent=1 // pred_check
      _
    $region15: #{_mlp_apply.1} parent=1 // pred_check_branch
      %18 = sbr.rel (0) target = $region17
    $region16: #{_mlp_apply.1} parent=1 // pred_region
      _
    $region17: #{_mlp_apply.1} parent=1 // pred_fallthru
      _
    // Predicated region
    $region18: #{_mlp_apply.1} parent=1 // pred_check
      _
    $region19: #{_mlp_apply.1} parent=1 // pred_check_branch
      %20 = sbr.rel (0) target = $region21
    $region20: #{_mlp_apply.1} parent=1 // pred_region
      _
    $region21: #{_mlp_apply.1} parent=1 // pred_fallthru
      _
    %v22 = vld [vmem:[%s0] sm:$0xf]
    %v23 = vld [vmem:[%s0 + $0x4] sm:$0xf]
    %v24 = vld [vmem:[%s1] sm:$0xf]
    %v25 = vld [vmem:[%s1 + $0x4] sm:$0xf]
    %v26 = vld [vmem:[%s1 + $0x8] sm:$0xf]
    %v27 = vld [vmem:[%s1 + $0xc] sm:$0xf]
    %v28 = vld [vmem:[%s2] sm:$0x1]
    %v29 = vunpack.c.l.bf16 %v28
    %v30 = vlaneseq
    %v31 = vshrl.u32 %v30, 7
    %v32 = vsub.s32 0, %v31
    %v33 = vrot.slane %v29, %v32
    %v36 = vunpack.c.l.b16 %v22
    %v37 = vunpack.c.l.b16 %v23
    %v38 = vpack.c.b16 %v37, %v36
    %v43 = vunpack.c.l.b16 %v24
    %v44 = vunpack.c.l.b16 %v25
    %v45 = vunpack.c.l.b16 %v26
    %v46 = vunpack.c.l.b16 %v27
    %v47 = vpack.c.b16 %v44, %v43
    %v48 = vpack.c.b16 %v46, %v45
    %vm51 = vcmask 261120
    %v53 = vsel %vm51, %v38, 0
    %55 = vmatprep.subr.bf16.mxu0 0
    %56 = vmatpush1.bf16.msra.mxu0 0
    %57 = vmatprep.subr.bf16.mxu0 0
    %58 = vmatpush1.bf16.msra.mxu0 0
    %59 = vmatprep.subr.bf16.mxu0 0
    %60 = vmatpush1.bf16.msra.mxu0 0
    %61 = vmatprep.subr.bf16.mxu0 0
    %62 = vmatpush1.bf16.msra.mxu0 0
    %63 = vmatprep.subr.bf16.mxu0 0
    %64 = vmatpush1.bf16.msra.mxu0 0
    %65 = vmatprep.subr.bf16.mxu0 0
    %66 = vmatpush1.bf16.msra.mxu0 0
    %67 = vmatprep.subr.bf16.mxu0 0
    %68 = vmatpush1.bf16.msra.mxu0 %v48
    %69 = vmatprep.subr.bf16.mxu0 0
    %70 = vmatpush1.bf16.msra.mxu0 %v47
    %71 = vmatprep.subr.bf16.mxu0 0
    %72 = vmatpush2.bf16.msra.mxu0 0
    %73 = vmatprep.subr.bf16.mxu0 0
    %74 = vmatpush2.bf16.msra.mxu0 0
    %75 = vmatprep.subr.bf16.mxu0 0
    %76 = vmatpush2.bf16.msra.mxu0 0
    %77 = vmatprep.subr.bf16.mxu0 0
    %78 = vmatpush2.bf16.msra.mxu0 0
    %79 = vmatprep.subr.bf16.mxu0 0
    %80 = vmatpush2.bf16.msra.mxu0 0
    %81 = vmatprep.subr.bf16.mxu0 0
    %82 = vmatpush2.bf16.msra.mxu0 0
    %83 = vmatprep.subr.bf16.mxu0 0
    %84 = vmatpush2.bf16.msra.mxu0 0
    %85 = vmatprep.subr.bf16.mxu0 0
    %86 = vmatpush2.bf16.msra.mxu0 0
    %87 = vmatprep.mubr.bf16.mxu0 0
    %88 = vmatmul.mubr.bf16.gmra.mxu0 %v53
    %v89 = vpop.f32.mrf.mxu0
    %v90 = vadd.f32 %v33, %v89
    %v91 = vpop.f32.mrf.mxu0
    %v92 = vpop.f32.mrf.mxu0
    %v93 = vadd.f32 %v33, %v92
    %v94 = vpop.f32.mrf.mxu0
    %95 = vdwg.mxu0
    %v96 = vmul.f32 %v90, %v90
    %v97 = vmul.f32 %v93, %v93
    %v98 = vmul.f32 %v90, %v96
    %v99 = vmul.f32 %v93, %v97
    %v100 = vmul.f32 %v98, 0.044715
    %v101 = vmul.f32 %v99, 0.044715
    %v102 = vadd.f32 %v90, %v100
    %v103 = vadd.f32 %v93, %v101
    %v104 = vmul.f32 %v102, 0.7978846
    %v105 = vmul.f32 %v103, 0.7978846
    %v106 = vtanh.pop %v104
    %v107 = vtanh.pop %v105
    %v108 = vadd.f32 %v106, 1.0
    %v109 = vadd.f32 %v107, 1.0
    %v110 = vmul.f32 %v108, 0.5
    %v111 = vmul.f32 %v109, 0.5
    %v112 = vmul.f32 %v90, %v110
    %v113 = vmul.f32 %v93, %v111
    %v114 = vpack.c.bf16 %v113, %v112
    %v115 = vld [vmem:[%s3] sm:$0xf]
    %v116 = vld [vmem:[%s3 + $0x4] sm:$0xf]
    %v117 = vld [vmem:[%s3 + $0x8] sm:$0xf]
    %v118 = vld [vmem:[%s3 + $0xc] sm:$0xf]
    %v119 = vld [vmem:[%s3 + $0x10] sm:$0xf]
    %v120 = vld [vmem:[%s3 + $0x14] sm:$0xf]
    %v121 = vld [vmem:[%s3 + $0x18] sm:$0xf]
    %v122 = vld [vmem:[%s3 + $0x1c] sm:$0xf]
    %v123 = vld [vmem:[%s4] sm:$0x1]
    %v124 = vunpack.c.l.bf16 %v123
    %v125 = vlaneseq
    %v126 = vshrl.u32 %v125, 7
    %v127 = vsub.s32 0, %v126
    %v128 = vrot.slane %v124, %v127
    %v137 = vunpack.c.l.b16 %v115
    %v138 = vunpack.c.l.b16 %v116
    %v139 = vunpack.c.l.b16 %v117
    %v140 = vunpack.c.l.b16 %v118
    %v141 = vunpack.c.l.b16 %v119
    %v142 = vunpack.c.l.b16 %v120
    %v143 = vunpack.c.l.b16 %v121
    %v144 = vunpack.c.l.b16 %v122
    %v145 = vpack.c.b16 %v138, %v137
    %v146 = vpack.c.b16 %v140, %v139
    %v147 = vpack.c.b16 %v142, %v141
    %v148 = vpack.c.b16 %v144, %v143
    %vm153 = vcmask 523264
    %v155 = vsel %vm153, %v114, 0
    %157 = vmatprep.subr.bf16.mxu0 0
    %158 = vmatpush1.bf16.msra.mxu0 0
    %159 = vmatprep.subr.bf16.mxu0 0
    %160 = vmatpush1.bf16.msra.mxu0 0
    %161 = vmatprep.subr.bf16.mxu0 0
    %162 = vmatpush1.bf16.msra.mxu0 0
    %163 = vmatprep.subr.bf16.mxu0 0
    %164 = vmatpush1.bf16.msra.mxu0 0
    %165 = vmatprep.subr.bf16.mxu0 0
    %166 = vmatpush1.bf16.msra.mxu0 %v148
    %167 = vmatprep.subr.bf16.mxu0 0
    %168 = vmatpush1.bf16.msra.mxu0 %v147
    %169 = vmatprep.subr.bf16.mxu0 0
    %170 = vmatpush1.bf16.msra.mxu0 %v146
    %171 = vmatprep.subr.bf16.mxu0 0
    %172 = vmatpush1.bf16.msra.mxu0 %v145
    %173 = vmatprep.subr.bf16.mxu0 0
    %174 = vmatpush2.bf16.msra.mxu0 0
    %175 = vmatprep.subr.bf16.mxu0 0
    %176 = vmatpush2.bf16.msra.mxu0 0
    %177 = vmatprep.subr.bf16.mxu0 0
    %178 = vmatpush2.bf16.msra.mxu0 0
    %179 = vmatprep.subr.bf16.mxu0 0
    %180 = vmatpush2.bf16.msra.mxu0 0
    %181 = vmatprep.subr.bf16.mxu0 0
    %182 = vmatpush2.bf16.msra.mxu0 0
    %183 = vmatprep.subr.bf16.mxu0 0
    %184 = vmatpush2.bf16.msra.mxu0 0
    %185 = vmatprep.subr.bf16.mxu0 0
    %186 = vmatpush2.bf16.msra.mxu0 0
    %187 = vmatprep.subr.bf16.mxu0 0
    %188 = vmatpush2.bf16.msra.mxu0 0
    %189 = vmatprep.mubr.bf16.mxu0 0
    %190 = vmatmul.mubr.bf16.gmra.mxu0 %v155
    %v191 = vpop.f32.mrf.mxu0
    %v192 = vadd.f32 %v128, %v191
    %v193 = vpop.f32.mrf.mxu0
    %v194 = vpop.f32.mrf.mxu0
    %v195 = vadd.f32 %v128, %v194
    %v196 = vpop.f32.mrf.mxu0
    %197 = vdwg.mxu0
    %v198 = vpack.c.bf16 %v195, %v192
    %v200 = vunpack.c.l.b16 %v198
    %v201 = vunpack.c.h.b16 %v198
    %v202 = vpack.c.b16 %v200, %v200
    %v203 = vpack.c.b16 %v201, %v201
    %vm206 = vcmask 257024
    %207 = vst.msk [vmem:[#allocation2] sm:$0xf] %vm206, %v202
    %208 = vst.msk [vmem:[#allocation2 + $0x4] sm:$0xf] %vm206, %v203
    // Predicated region
    $region22: #{_mlp_apply.1} parent=1 // pred_check
      _
    $region23: #{_mlp_apply.1} parent=1 // pred_check_branch
      %210 = sbr.rel (0) target = $region25
    $region24: #{_mlp_apply.1} parent=1 // pred_region
      %s212 = ssub.s32 128, 128
      %213 = vsyncadd [#allocation3], %s212
      %s214 = sshll.u32 [#allocation2], 4
      %s215 = int_to_ptr.vmem [resolvable:$true] %s214
      %220 = dma.vmem_to_hbm [thread:$0]  %s215, 128, %s5, [#allocation3], 64, 64, 4
    $region25: #{_mlp_apply.1} parent=1 // pred_fallthru
      _
    // Predicated region
    $region26: #{_mlp_apply.1} parent=1 // pred_check
      _
    $region27: #{_mlp_apply.1} parent=1 // pred_check_branch
      %222 = sbr.rel (0) target = $region29
    $region28: #{_mlp_apply.1} parent=1 // pred_region
      %223 = dma.done [#allocation3], 128
    $region29: #{_mlp_apply.1} parent=1 // pred_fallthru
      _
    %224 = vsyncpa [#allocation3], 1

</llo_original>
